<compile_context>
chip_gen: v5e
topology: v5e:2x2
jax: 0.10.0
libtpu: 0.0.40
codegen_flags: <defaults>
</compile_context>

<pallas_src>
import functools

import jax
import jax.numpy as jnp
from jax import lax
from jax.experimental import pallas as pl
from jax.experimental.pallas import tpu as pltpu


def _max_identity(dtype):
    """Identity element for `max` in this dtype (dtype-min, not -inf, for ints)."""
    dtype = jnp.dtype(dtype)
    if jnp.issubdtype(dtype, jnp.floating):
        return float("-inf")
    if jnp.issubdtype(dtype, jnp.integer):
        return int(jnp.iinfo(dtype).min)
    if dtype == jnp.bool_:
        return False
    raise NotImplementedError(f"maxpool2d_pallas: unsupported dtype {dtype}")


def _maxpool_kernel(x_ref, o_ref, *, k, s, w, h_out, w_out, fill):
    """Pool a (bt, H*W) tile into (bt, H_out*W_out).

    Batch lives on sublanes, the flattened spatial axis on lanes, so every
    select/max below is dense over the whole tile.  The per-output-position
    window mask is static (k contiguous lane ranges); the window max is one
    lane-axis reduction.  For the Net case (5x5 -> 1x1) this is a single
    select + reduce + full-tile store per grid step.
    """
    x = x_ref[...]                                     # (bt, H*W)
    hw = x.shape[-1]
    neg = jnp.asarray(fill, dtype=x.dtype)
    # Flat spatial (lane) index, built once and shared by all windows.
    pos = lax.broadcasted_iota(jnp.int32, (1, hw), 1)

    # TODO(synk): for large H_out*W_out this re-scans the tile once per output
    # position; fine for the 5x5 Net case (one position), revisit if the
    # module is ever used with big spatial inputs.
    for oh in range(h_out):
        for ow in range(w_out):
            in_win = None
            for kh in range(k):                        # k contiguous lane runs
                base = (oh * s + kh) * w + ow * s
                seg = (pos >= base) & (pos < base + k)
                in_win = seg if in_win is None else (in_win | seg)
            masked = jnp.where(in_win, x, neg)         # dense select, (bt, H*W)
            col = jnp.max(masked, axis=1, keepdims=True)   # (bt, 1)
            p = oh * w_out + ow
            o_ref[:, p : p + 1] = col                  # direct store, no concat


def maxpool2d_pallas(x, kernel_size=3, stride=None, ceil_mode=False,
                     block_rows=8192):
    """Pallas equivalent of torch.nn.MaxPool2d(kernel_size, ceil_mode=False) on NCHW."""
    if stride is None:
        stride = kernel_size
    assert not ceil_mode, "Net uses ceil_mode=False (floor output size)."

    n, c, h, w = x.shape
    k, s = kernel_size, stride
    h_out = (h - k) // s + 1
    w_out = (w - k) // s + 1
    assert h_out >= 1 and w_out >= 1, "pooling window larger than input"
    b = n * c

    # Metadata-only reshape: batch on sublanes, flat spatial on lanes.
    x2 = x.reshape(b, h * w)

    # Cap rows per block so one VMEM buffer (rows x 128-lane-padded) <= ~4 MiB.
    lane_bytes = pl.cdiv(max(h * w, h_out * w_out), 128) * 128 * x.dtype.itemsize
    rows_cap = max(8, ((4 * 1024 * 1024) // lane_bytes) // 8 * 8)
    block_rows = min(block_rows, rows_cap)

    # Batch-tile rows per grid step: multiple of 8 (sublane granule), at most
    # ceil(B/2) so a v7x megacore gets >= 2 parallel steps, capped by
    # block_rows.  Tiny batches (<= 8 rows) use a single full block.
    if b <= 8:
        bt = b
    else:
        bt = min(block_rows, max(8, pl.cdiv(pl.cdiv(b, 2), 8) * 8))
    grid = (pl.cdiv(b, bt),)

    out = pl.pallas_call(
        functools.partial(
            _maxpool_kernel, k=k, s=s, w=w, h_out=h_out, w_out=w_out,
            fill=_max_identity(x.dtype)),
        out_shape=jax.ShapeDtypeStruct((b, h_out * w_out), x.dtype),
        grid=grid,
        in_specs=[pl.BlockSpec((bt, h * w), lambda i: (i, 0))],
        out_specs=pl.BlockSpec((bt, h_out * w_out), lambda i: (i, 0)),
        compiler_params=pltpu.CompilerParams(
            dimension_semantics=("parallel",),   # independent batch blocks
            vmem_limit_bytes=32 * 1024 * 1024,
        ),
    )(x2)

    return out.reshape(n, c, h_out, w_out)


def _maxpool_reference(x, kernel_size=3, stride=3):
    """Pure-JAX reference (reduce_window) for correctness checking."""
    return lax.reduce_window(
        x,
        -jnp.inf,
        lax.max,
        window_dimensions=(1, 1, kernel_size, kernel_size),
        window_strides=(1, 1, stride, stride),
        padding="VALID",
    )


if __name__ == "__main__":
    key = jax.random.PRNGKey(0)
    k1, k2, k3 = jax.random.split(key, 3)

    # Case 1: exactly what the torch script does -- input.reshape(-1, 1, 5, 5).
    flat = jax.random.normal(k1, (2 * 1 * 5 * 5,), dtype=jnp.float32)
    x_small = flat.reshape(-1, 1, 5, 5)                       # (2, 1, 5, 5)
    out_small = jax.block_until_ready(maxpool2d_pallas(x_small))
    ref_small = _maxpool_reference(x_small)
    assert out_small.shape == ref_small.shape == (2, 1, 1, 1), out_small.shape
    assert jnp.allclose(out_small, ref_small), "Pallas maxpool mismatch (small)"

    # Case 2: bigger batch -> >= 2 "parallel" grid steps + remainder block.
    x_big = jax.random.normal(k2, (300, 1, 5, 5), dtype=jnp.float32)
    out_big = jax.block_until_ready(maxpool2d_pallas(x_big))
    ref_big = _maxpool_reference(x_big)
    assert out_big.shape == ref_big.shape == (300, 1, 1, 1), out_big.shape
    assert jnp.allclose(out_big, ref_big), "Pallas maxpool mismatch (big)"

    # Case 3: multi-position output (9x9 -> 3x3) exercises the general path.
    x_gen = jax.random.normal(k3, (4, 3, 9, 9), dtype=jnp.float32)
    out_gen = jax.block_until_ready(maxpool2d_pallas(x_gen))
    ref_gen = _maxpool_reference(x_gen)
    assert out_gen.shape == ref_gen.shape == (4, 3, 3, 3), out_gen.shape
    assert jnp.allclose(out_gen, ref_gen), "Pallas maxpool mismatch (general)"

    print("KERNEL_OK")
</pallas_src>

<mosaic_0001>
module attributes {stable_mosaic.version = 11 : i64} {
  func.func @_maxpool_kernel(%arg0: i32, %arg1: memref<2x25xf32, #tpu.memory_space<vmem>>, %arg2: memref<2x1xf32, #tpu.memory_space<vmem>>) attributes {dimension_semantics = [#tpu.dimension_semantics<parallel>], iteration_bounds = array<i64: 1>, scalar_prefetch = 0 : i64, scratch_operands = 0 : i64, tpu.core_type = #tpu.core_type<tc>, window_params = [{transform_indices = @transform_0, window_bounds = array<i64: 2, 25>}, {transform_indices = @transform_1, window_bounds = array<i64: 2, 1>}]} {
    %c0 = arith.constant 0 : index
    %c0_0 = arith.constant 0 : index
    %0 = vector.load %arg1[%c0, %c0_0] : memref<2x25xf32, #tpu.memory_space<vmem>>, vector<2x25xf32>
    %1 = tpu.iota {dimensions = array<i32: 1>} : vector<1x25xi32>
    %c0_i32 = arith.constant 0 : i32
    %2 = vector.broadcast %c0_i32 : i32 to vector<1x25xi32>
    %3 = arith.cmpi sge, %1, %2 : vector<1x25xi32>
    %c3_i32 = arith.constant 3 : i32
    %4 = vector.broadcast %c3_i32 : i32 to vector<1x25xi32>
    %5 = arith.cmpi slt, %1, %4 : vector<1x25xi32>
    %6 = arith.andi %3, %5 : vector<1x25xi1>
    %c5_i32 = arith.constant 5 : i32
    %7 = vector.broadcast %c5_i32 : i32 to vector<1x25xi32>
    %8 = arith.cmpi sge, %1, %7 : vector<1x25xi32>
    %c8_i32 = arith.constant 8 : i32
    %9 = vector.broadcast %c8_i32 : i32 to vector<1x25xi32>
    %10 = arith.cmpi slt, %1, %9 : vector<1x25xi32>
    %11 = arith.andi %8, %10 : vector<1x25xi1>
    %12 = arith.ori %6, %11 : vector<1x25xi1>
    %c10_i32 = arith.constant 10 : i32
    %13 = vector.broadcast %c10_i32 : i32 to vector<1x25xi32>
    %14 = arith.cmpi sge, %1, %13 : vector<1x25xi32>
    %c13_i32 = arith.constant 13 : i32
    %15 = vector.broadcast %c13_i32 : i32 to vector<1x25xi32>
    %16 = arith.cmpi slt, %1, %15 : vector<1x25xi32>
    %17 = arith.andi %14, %16 : vector<1x25xi1>
    %18 = arith.ori %12, %17 : vector<1x25xi1>
    %cst = arith.constant 0xFF800000 : f32
    %19 = vector.shape_cast %18 : vector<1x25xi1> to vector<1x25xi1>
    %20 = vector.broadcast %19 : vector<1x25xi1> to vector<2x25xi1>
    %21 = vector.broadcast %cst : f32 to vector<2x25xf32>
    %22 = arith.select %20, %0, %21 : vector<2x25xi1>, vector<2x25xf32>
    %cst_1 = arith.constant dense<0xFF800000> : vector<2xf32>
    %23 = vector.multi_reduction <maximumf>, %22, %cst_1 [1] : vector<2x25xf32> to vector<2xf32>
    %24 = vector.shape_cast %23 : vector<2xf32> to vector<2x1xf32>
    %c0_2 = arith.constant 0 : index
    %c0_3 = arith.constant 0 : index
    %25 = vector.load %arg2[%c0_2, %c0_3] : memref<2x1xf32, #tpu.memory_space<vmem>>, vector<2x1xf32>
    tpu.vector_store %arg2[%c0_2, %c0_3], %24 {strides = array<i32>} : memref<2x1xf32, #tpu.memory_space<vmem>>, vector<2x1xf32>,
    return
  }
  func.func @transform_0(%arg0: i32) -> (i32, i32) {
    %c0_i32 = arith.constant 0 : i32
    %c0_i32_0 = arith.constant 0 : i32
    return %arg0, %c0_i32 : i32, i32
  }
  func.func @transform_1(%arg0: i32) -> (i32, i32) {
    %c0_i32 = arith.constant 0 : i32
    %c0_i32_0 = arith.constant 0 : i32
    return %arg0, %c0_i32 : i32, i32
  }
}

</mosaic_0001>

<llo_original>
// kernel: tpu_custom_call.1
$region0: #{tpu_custom_call.1}
  #allocation0 [shape = 'u32[]', space=smem, size = 0x4, offset = 0x4, fixed_abs, tag = 'smem constant byte address 0x4 - core index']
  #allocation1 [shape = 'u32[72,128]{1,0:T(1,128)}', space=vmem, size = 0x9000, scoped, tag = 'internal scratch']
  %s0 = inlined_call_operand.hbm [shape: f32[2,25], index: 0, kind: input, shape index: {}]
  %s1 = inlined_call_operand.vmem [shape: f32[2,1], index: 1, kind: output, shape index: {}]
  %s2 = sld [smem:[#allocation0]]
  $region18: #{tpu_custom_call.1} parent=0
    _
  %s4 = ssub.s32 1, %s2
  %s5 = scalar_select 0, %s4, %s2
  $region1: #{tpu_custom_call.1} parent=0
    #allocation2 [shape = 'u8[1024]{0}', space=vmem, size = 0x400, scoped, tag = 'input window, operand 0, single buffered']
    #allocation3 [shape = 's32[1]{0}', space=sflag, size = 0x4, scoped, tag = 'scoped memory for tpu_custom_call.1']
    %6 = vsyncpa [#allocation3], 0
    // Predicated region
    $region2: #{tpu_custom_call.1} parent=1 // pred_check
      _
    $region3: #{tpu_custom_call.1} parent=1 // pred_check_branch
      %8 = sbr.rel (0) target = $region5
    $region4: #{tpu_custom_call.1} parent=1 // pred_region
      %10 = vsyncadd [#allocation3], 0
      %s12 = sshll.u32 %s0, 4
      %s13 = int_to_ptr.hbm [resolvable:$true] %s12
      %s14 = sshll.u32 [#allocation2], 4
      %s15 = int_to_ptr.vmem [resolvable:$true] %s14
      %17 = dma.hbm_to_vmem [thread:$0]  %s13, 32, %s15, [#allocation3]
    $region5: #{tpu_custom_call.1} parent=1 // pred_fallthru
      _
    // Predicated region
    $region6: #{tpu_custom_call.1} parent=1 // pred_check
      _
    $region7: #{tpu_custom_call.1} parent=1 // pred_check_branch
      %19 = sbr.rel (0) target = $region9
    $region8: #{tpu_custom_call.1} parent=1 // pred_region
      %21 = dma.done [#allocation3], 32
    $region9: #{tpu_custom_call.1} parent=1 // pred_fallthru
      _
    %v22 = vld [vmem:[#allocation2] sm:$0x3]
    %v23 = vlaneseq
    %v24 = vand.u32 %v23, 127
    %vm25 = vcmp.ge.s32.totalorder %v24, 0
    %vm26 = vcmp.lt.s32.totalorder %v24, 3
    %vm27 = vmand %vm25, %vm26
    %vm28 = vcmp.ge.s32.totalorder %v24, 5
    %vm29 = vcmp.lt.s32.totalorder %v24, 8
    %vm30 = vmand %vm28, %vm29
    %vm31 = vmor %vm27, %vm30
    %vm32 = vcmp.ge.s32.totalorder %v24, 10
    %vm33 = vcmp.lt.s32.totalorder %v24, 13
    %vm34 = vmand %vm32, %vm33
    %vm35 = vmor %vm31, %vm34
    %v36 = vsel %vm35, 1, 0
    %vm37 = vcmp.eq.s32.totalorder %v36, 1
    %v38 = vsel %vm37, %v22, -inf
    %vm39 = vcmask 197632
    %v40 = vsel %vm39, %v38, -inf
    %41 = vmax.xlane.f32.xlu0 %v40
    %v42 = vpop.xlane.xlu0 %41
    %vm43 = vcmask 1024
    %44 = vst.msk [vmem:[%s1] sm:$0x3] %vm43, %v42
    // Predicated region
    $region10: #{tpu_custom_call.1} parent=1 // pred_check
      _
    $region11: #{tpu_custom_call.1} parent=1 // pred_check_branch
      %46 = sbr.rel (0) target = $region13
    $region12: #{tpu_custom_call.1} parent=1 // pred_region
      _
    $region13: #{tpu_custom_call.1} parent=1 // pred_fallthru
      _
    // Predicated region
    $region14: #{tpu_custom_call.1} parent=1 // pred_check
      _
    $region15: #{tpu_custom_call.1} parent=1 // pred_check_branch
      %48 = sbr.rel (0) target = $region17
    $region16: #{tpu_custom_call.1} parent=1 // pred_region
      _
    $region17: #{tpu_custom_call.1} parent=1 // pred_fallthru
      _
    %49 = vsyncpa [#allocation3], 1

</llo_original>
